<compile_context>
chip_gen: v7x
topology: tpu7x:2x2x1
jax: 0.10.0
libtpu: 0.0.40
codegen_flags: <defaults>
</compile_context>

<pallas_src>
import jax
import jax.numpy as jnp
from jax.experimental import pallas as pl
from jax.experimental.pallas import tpu as pltpu  # noqa: F401  (not needed at these shapes)


def _make_lstm_kernel(seq_len: int, batch: int, hidden: int):
    H = hidden

    def kernel(x_ref, wih_ref, whh_ref, b_ref, wlin_ref, out_ref):
        # Hoisted input projection + (folded, g-scaled) bias for ALL timesteps:
        # one batched MXU matmul, outside the serial recurrence.
        xw = (
            jnp.dot(x_ref[...], wih_ref[...], preferred_element_type=jnp.float32)
            + b_ref[...]
        )  # (T*B, 4H)
        whh = whh_ref[...]  # (H, 4H); stays VMEM-resident for the whole sequence

        h = jnp.zeros((batch, H), jnp.float32)
        c = jnp.zeros((batch, H), jnp.float32)

        # Fully unrolled recurrence; exactly one small MXU matmul and one full-width EUP
        # sigmoid per step on the serial chain.
        for t in range(seq_len):
            gates = xw[t * batch:(t + 1) * batch, :] + jnp.dot(
                h, whh, preferred_element_type=jnp.float32
            )  # (B, 4H) — one (8,128) vreg

            # Single full-width transcendental; g-band pre-activations were pre-scaled by 2
            # at weight-prep time, so tanh(x_g) = 2*sigmoid(2*x_g) - 1 = 2*sg_g - 1.
            sg = jax.nn.sigmoid(gates)
            i = sg[:, 0 * H:1 * H]
            f = sg[:, 1 * H:2 * H]
            g = 2.0 * sg[:, 2 * H:3 * H] - 1.0
            o = sg[:, 3 * H:4 * H]

            c = f * c + i * g
            h = o * jnp.tanh(c)

        # Bias-free final linear on the last timestep's hidden state.
        out_ref[...] = jnp.dot(
            h, wlin_ref[...], preferred_element_type=jnp.float32
        ).astype(out_ref.dtype)

    return kernel


def lstm_net_forward(x, w_ih, w_hh, b_ih, b_hh, w_lin):
    """x: (T, B, D) f32. Weights in PyTorch layout:
       w_ih (4H, D), w_hh (4H, H), b_ih (4H,), b_hh (4H,), w_lin (O, H)."""
    T, B, D = x.shape
    H4 = w_ih.shape[0]
    H = H4 // 4
    O = w_lin.shape[0]

    # --- layout prep (done once at parameter-load time in a real model) ------------------
    # Scale ONLY the g-band (columns 2H:3H) by 2 so the kernel can use the
    # tanh(x) = 2*sigmoid(2x) - 1 identity with a single full-width sigmoid.
    g_scale = jnp.ones((H4,), jnp.float32).at[2 * H:3 * H].set(2.0)
    wih_t = jnp.transpose(w_ih) * g_scale[None, :]            # (D, 4H)
    whh_t = jnp.transpose(w_hh) * g_scale[None, :]            # (H, 4H)
    bias = ((b_ih + b_hh) * g_scale).reshape(1, H4)           # (1, 4H)
    wlin_t = jnp.transpose(w_lin)                              # (H, O)
    x2d = x.reshape(T * B, D)                                  # contiguous seq-major rows
    # --------------------------------------------------------------------------------------

    kernel = _make_lstm_kernel(T, B, H)

    # Whole problem (~25 KB) fits in VMEM with huge margin on v5e/v6e/v7x: one grid-free
    # invocation, whole-array blocks.  No vmem_limit / buffering tuning needed (per review).
    return pl.pallas_call(
        kernel,
        out_shape=jax.ShapeDtypeStruct((B, O), jnp.float32),
        in_specs=[
            pl.BlockSpec((T * B, D), lambda: (0, 0)),
            pl.BlockSpec((D, H4), lambda: (0, 0)),
            pl.BlockSpec((H, H4), lambda: (0, 0)),
            pl.BlockSpec((1, H4), lambda: (0, 0)),
            pl.BlockSpec((H, O), lambda: (0, 0)),
        ],
        out_specs=pl.BlockSpec((B, O), lambda: (0, 0)),
    )(x2d, wih_t, whh_t, bias, wlin_t)


def lstm_net_reference(x, w_ih, w_hh, b_ih, b_hh, w_lin):
    """Pure-JAX reference matching torch.nn.LSTM semantics (gate order i,f,g,o)."""
    T, B, D = x.shape
    H = w_hh.shape[1]

    def step(carry, x_t):
        h, c = carry
        gates = x_t @ w_ih.T + h @ w_hh.T + b_ih + b_hh
        i = jax.nn.sigmoid(gates[:, 0 * H:1 * H])
        f = jax.nn.sigmoid(gates[:, 1 * H:2 * H])
        g = jnp.tanh(gates[:, 2 * H:3 * H])
        o = jax.nn.sigmoid(gates[:, 3 * H:4 * H])
        c = f * c + i * g
        h = o * jnp.tanh(c)
        return (h, c), h

    h0 = jnp.zeros((B, H), jnp.float32)
    c0 = jnp.zeros((B, H), jnp.float32)
    (h_T, _), _ = jax.lax.scan(step, (h0, c0), x)
    return h_T @ w_lin.T


if __name__ == "__main__":
    # small shapes implied by the module: seq T, batch B, input D, hidden H, output O
    T, B, D, H, O = 8, 8, 16, 32, 8

    key = jax.random.PRNGKey(0)
    kx, k1, k2, k3, k4, k5 = jax.random.split(key, 6)

    x = jax.random.normal(kx, (T, B, D), dtype=jnp.float32)

    scale = 1.0 / jnp.sqrt(H).astype(jnp.float32)
    w_ih = jax.random.uniform(k1, (4 * H, D), jnp.float32, -scale, scale)
    w_hh = jax.random.uniform(k2, (4 * H, H), jnp.float32, -scale, scale)
    b_ih = jax.random.uniform(k3, (4 * H,), jnp.float32, -scale, scale)
    b_hh = jax.random.uniform(k4, (4 * H,), jnp.float32, -scale, scale)
    w_lin = jax.random.uniform(k5, (O, H), jnp.float32, -scale, scale)

    out = lstm_net_forward(x, w_ih, w_hh, b_ih, b_hh, w_lin)
    out = jax.block_until_ready(out)

    ref = lstm_net_reference(x, w_ih, w_hh, b_ih, b_hh, w_lin)
    assert out.shape == (B, O)
    assert jnp.allclose(out, ref, atol=1e-4, rtol=1e-4), "mismatch vs reference"

    print("KERNEL_OK")
</pallas_src>

<mosaic_0001>
module attributes {stable_mosaic.version = 11 : i64} {
  func.func @kernel(%arg0: memref<64x16xf32, #tpu.memory_space<vmem>>, %arg1: memref<16x128xf32, #tpu.memory_space<vmem>>, %arg2: memref<32x128xf32, #tpu.memory_space<vmem>>, %arg3: memref<1x128xf32, #tpu.memory_space<vmem>>, %arg4: memref<32x8xf32, #tpu.memory_space<vmem>>, %arg5: memref<8x8xf32, #tpu.memory_space<vmem>>) attributes {dimension_semantics = [], scalar_prefetch = 0 : i64, scratch_operands = 0 : i64, tpu.core_type = #tpu.core_type<tc>} {
    %c0 = arith.constant 0 : index
    %c0_0 = arith.constant 0 : index
    %0 = vector.load %arg0[%c0, %c0_0] : memref<64x16xf32, #tpu.memory_space<vmem>>, vector<64x16xf32>
    %c0_1 = arith.constant 0 : index
    %c0_2 = arith.constant 0 : index
    %1 = vector.load %arg1[%c0_1, %c0_2] : memref<16x128xf32, #tpu.memory_space<vmem>>, vector<16x128xf32>
    %cst = arith.constant dense<0.000000e+00> : vector<64x128xf32>
    %2 = tpu.matmul %0, %1, %cst {dimension_numbers = #tpu.dot_dimension_numbers<[1], [0], [0], [1], [0, 0, 1, 1], [], []>} : vector<64x16xf32>, vector<16x128xf32>, vector<64x128xf32> -> vector<64x128xf32>
    %c0_3 = arith.constant 0 : index
    %c0_4 = arith.constant 0 : index
    %3 = vector.load %arg3[%c0_3, %c0_4] : memref<1x128xf32, #tpu.memory_space<vmem>>, vector<1x128xf32>
    %4 = vector.broadcast %3 : vector<1x128xf32> to vector<64x128xf32>
    %5 = arith.addf %2, %4 : vector<64x128xf32>
    %c0_5 = arith.constant 0 : index
    %c0_6 = arith.constant 0 : index
    %6 = vector.load %arg2[%c0_5, %c0_6] : memref<32x128xf32, #tpu.memory_space<vmem>>, vector<32x128xf32>
    %cst_7 = arith.constant 0.000000e+00 : f32
    %7 = vector.broadcast %cst_7 : f32 to vector<8x32xf32>
    %cst_8 = arith.constant 0.000000e+00 : f32
    %8 = vector.broadcast %cst_8 : f32 to vector<8x32xf32>
    %9 = vector.extract_strided_slice %5 {offsets = [0, 0], sizes = [8, 128], strides = [1, 1]} : vector<64x128xf32> to vector<8x128xf32>
    %cst_9 = arith.constant dense<0.000000e+00> : vector<8x128xf32>
    %10 = tpu.matmul %7, %6, %cst_9 {dimension_numbers = #tpu.dot_dimension_numbers<[1], [0], [0], [1], [0, 0, 1, 1], [], []>} : vector<8x32xf32>, vector<32x128xf32>, vector<8x128xf32> -> vector<8x128xf32>
    %11 = arith.addf %9, %10 : vector<8x128xf32>
    %12 = arith.negf %11 : vector<8x128xf32>
    %13 = math.exp %12 : vector<8x128xf32>
    %cst_10 = arith.constant 1.000000e+00 : f32
    %14 = vector.broadcast %cst_10 : f32 to vector<8x128xf32>
    %15 = arith.addf %14, %13 : vector<8x128xf32>
    %16 = arith.divf %14, %15 : vector<8x128xf32>
    %17 = vector.extract_strided_slice %16 {offsets = [0, 0], sizes = [8, 32], strides = [1, 1]} : vector<8x128xf32> to vector<8x32xf32>
    %18 = vector.extract_strided_slice %16 {offsets = [0, 32], sizes = [8, 32], strides = [1, 1]} : vector<8x128xf32> to vector<8x32xf32>
    %19 = vector.extract_strided_slice %16 {offsets = [0, 64], sizes = [8, 32], strides = [1, 1]} : vector<8x128xf32> to vector<8x32xf32>
    %cst_11 = arith.constant 2.000000e+00 : f32
    %20 = vector.broadcast %cst_11 : f32 to vector<8x32xf32>
    %21 = arith.mulf %20, %19 : vector<8x32xf32>
    %cst_12 = arith.constant 1.000000e+00 : f32
    %22 = vector.broadcast %cst_12 : f32 to vector<8x32xf32>
    %23 = arith.subf %21, %22 : vector<8x32xf32>
    %24 = vector.extract_strided_slice %16 {offsets = [0, 96], sizes = [8, 32], strides = [1, 1]} : vector<8x128xf32> to vector<8x32xf32>
    %25 = arith.mulf %18, %8 : vector<8x32xf32>
    %26 = arith.mulf %17, %23 : vector<8x32xf32>
    %27 = arith.addf %25, %26 : vector<8x32xf32>
    %28 = math.tanh %27 : vector<8x32xf32>
    %29 = arith.mulf %24, %28 : vector<8x32xf32>
    %30 = vector.extract_strided_slice %5 {offsets = [8, 0], sizes = [8, 128], strides = [1, 1]} : vector<64x128xf32> to vector<8x128xf32>
    %cst_13 = arith.constant dense<0.000000e+00> : vector<8x128xf32>
    %31 = tpu.matmul %29, %6, %cst_13 {dimension_numbers = #tpu.dot_dimension_numbers<[1], [0], [0], [1], [0, 0, 1, 1], [], []>} : vector<8x32xf32>, vector<32x128xf32>, vector<8x128xf32> -> vector<8x128xf32>
    %32 = arith.addf %30, %31 : vector<8x128xf32>
    %33 = arith.negf %32 : vector<8x128xf32>
    %34 = math.exp %33 : vector<8x128xf32>
    %cst_14 = arith.constant 1.000000e+00 : f32
    %35 = vector.broadcast %cst_14 : f32 to vector<8x128xf32>
    %36 = arith.addf %35, %34 : vector<8x128xf32>
    %37 = arith.divf %35, %36 : vector<8x128xf32>
    %38 = vector.extract_strided_slice %37 {offsets = [0, 0], sizes = [8, 32], strides = [1, 1]} : vector<8x128xf32> to vector<8x32xf32>
    %39 = vector.extract_strided_slice %37 {offsets = [0, 32], sizes = [8, 32], strides = [1, 1]} : vector<8x128xf32> to vector<8x32xf32>
    %40 = vector.extract_strided_slice %37 {offsets = [0, 64], sizes = [8, 32], strides = [1, 1]} : vector<8x128xf32> to vector<8x32xf32>
    %cst_15 = arith.constant 2.000000e+00 : f32
    %41 = vector.broadcast %cst_15 : f32 to vector<8x32xf32>
    %42 = arith.mulf %41, %40 : vector<8x32xf32>
    %cst_16 = arith.constant 1.000000e+00 : f32
    %43 = vector.broadcast %cst_16 : f32 to vector<8x32xf32>
    %44 = arith.subf %42, %43 : vector<8x32xf32>
    %45 = vector.extract_strided_slice %37 {offsets = [0, 96], sizes = [8, 32], strides = [1, 1]} : vector<8x128xf32> to vector<8x32xf32>
    %46 = arith.mulf %39, %27 : vector<8x32xf32>
    %47 = arith.mulf %38, %44 : vector<8x32xf32>
    %48 = arith.addf %46, %47 : vector<8x32xf32>
    %49 = math.tanh %48 : vector<8x32xf32>
    %50 = arith.mulf %45, %49 : vector<8x32xf32>
    %51 = vector.extract_strided_slice %5 {offsets = [16, 0], sizes = [8, 128], strides = [1, 1]} : vector<64x128xf32> to vector<8x128xf32>
    %cst_17 = arith.constant dense<0.000000e+00> : vector<8x128xf32>
    %52 = tpu.matmul %50, %6, %cst_17 {dimension_numbers = #tpu.dot_dimension_numbers<[1], [0], [0], [1], [0, 0, 1, 1], [], []>} : vector<8x32xf32>, vector<32x128xf32>, vector<8x128xf32> -> vector<8x128xf32>
    %53 = arith.addf %51, %52 : vector<8x128xf32>
    %54 = arith.negf %53 : vector<8x128xf32>
    %55 = math.exp %54 : vector<8x128xf32>
    %cst_18 = arith.constant 1.000000e+00 : f32
    %56 = vector.broadcast %cst_18 : f32 to vector<8x128xf32>
    %57 = arith.addf %56, %55 : vector<8x128xf32>
    %58 = arith.divf %56, %57 : vector<8x128xf32>
    %59 = vector.extract_strided_slice %58 {offsets = [0, 0], sizes = [8, 32], strides = [1, 1]} : vector<8x128xf32> to vector<8x32xf32>
    %60 = vector.extract_strided_slice %58 {offsets = [0, 32], sizes = [8, 32], strides = [1, 1]} : vector<8x128xf32> to vector<8x32xf32>
    %61 = vector.extract_strided_slice %58 {offsets = [0, 64], sizes = [8, 32], strides = [1, 1]} : vector<8x128xf32> to vector<8x32xf32>
    %cst_19 = arith.constant 2.000000e+00 : f32
    %62 = vector.broadcast %cst_19 : f32 to vector<8x32xf32>
    %63 = arith.mulf %62, %61 : vector<8x32xf32>
    %cst_20 = arith.constant 1.000000e+00 : f32
    %64 = vector.broadcast %cst_20 : f32 to vector<8x32xf32>
    %65 = arith.subf %63, %64 : vector<8x32xf32>
    %66 = vector.extract_strided_slice %58 {offsets = [0, 96], sizes = [8, 32], strides = [1, 1]} : vector<8x128xf32> to vector<8x32xf32>
    %67 = arith.mulf %60, %48 : vector<8x32xf32>
    %68 = arith.mulf %59, %65 : vector<8x32xf32>
    %69 = arith.addf %67, %68 : vector<8x32xf32>
    %70 = math.tanh %69 : vector<8x32xf32>
    %71 = arith.mulf %66, %70 : vector<8x32xf32>
    %72 = vector.extract_strided_slice %5 {offsets = [24, 0], sizes = [8, 128], strides = [1, 1]} : vector<64x128xf32> to vector<8x128xf32>
    %cst_21 = arith.constant dense<0.000000e+00> : vector<8x128xf32>
    %73 = tpu.matmul %71, %6, %cst_21 {dimension_numbers = #tpu.dot_dimension_numbers<[1], [0], [0], [1], [0, 0, 1, 1], [], []>} : vector<8x32xf32>, vector<32x128xf32>, vector<8x128xf32> -> vector<8x128xf32>
    %74 = arith.addf %72, %73 : vector<8x128xf32>
    %75 = arith.negf %74 : vector<8x128xf32>
    %76 = math.exp %75 : vector<8x128xf32>
    %cst_22 = arith.constant 1.000000e+00 : f32
    %77 = vector.broadcast %cst_22 : f32 to vector<8x128xf32>
    %78 = arith.addf %77, %76 : vector<8x128xf32>
    %79 = arith.divf %77, %78 : vector<8x128xf32>
    %80 = vector.extract_strided_slice %79 {offsets = [0, 0], sizes = [8, 32], strides = [1, 1]} : vector<8x128xf32> to vector<8x32xf32>
    %81 = vector.extract_strided_slice %79 {offsets = [0, 32], sizes = [8, 32], strides = [1, 1]} : vector<8x128xf32> to vector<8x32xf32>
    %82 = vector.extract_strided_slice %79 {offsets = [0, 64], sizes = [8, 32], strides = [1, 1]} : vector<8x128xf32> to vector<8x32xf32>
    %cst_23 = arith.constant 2.000000e+00 : f32
    %83 = vector.broadcast %cst_23 : f32 to vector<8x32xf32>
    %84 = arith.mulf %83, %82 : vector<8x32xf32>
    %cst_24 = arith.constant 1.000000e+00 : f32
    %85 = vector.broadcast %cst_24 : f32 to vector<8x32xf32>
    %86 = arith.subf %84, %85 : vector<8x32xf32>
    %87 = vector.extract_strided_slice %79 {offsets = [0, 96], sizes = [8, 32], strides = [1, 1]} : vector<8x128xf32> to vector<8x32xf32>
    %88 = arith.mulf %81, %69 : vector<8x32xf32>
    %89 = arith.mulf %80, %86 : vector<8x32xf32>
    %90 = arith.addf %88, %89 : vector<8x32xf32>
    %91 = math.tanh %90 : vector<8x32xf32>
    %92 = arith.mulf %87, %91 : vector<8x32xf32>
    %93 = vector.extract_strided_slice %5 {offsets = [32, 0], sizes = [8, 128], strides = [1, 1]} : vector<64x128xf32> to vector<8x128xf32>
    %cst_25 = arith.constant dense<0.000000e+00> : vector<8x128xf32>
    %94 = tpu.matmul %92, %6, %cst_25 {dimension_numbers = #tpu.dot_dimension_numbers<[1], [0], [0], [1], [0, 0, 1, 1], [], []>} : vector<8x32xf32>, vector<32x128xf32>, vector<8x128xf32> -> vector<8x128xf32>
    %95 = arith.addf %93, %94 : vector<8x128xf32>
    %96 = arith.negf %95 : vector<8x128xf32>
    %97 = math.exp %96 : vector<8x128xf32>
    %cst_26 = arith.constant 1.000000e+00 : f32
    %98 = vector.broadcast %cst_26 : f32 to vector<8x128xf32>
    %99 = arith.addf %98, %97 : vector<8x128xf32>
    %100 = arith.divf %98, %99 : vector<8x128xf32>
    %101 = vector.extract_strided_slice %100 {offsets = [0, 0], sizes = [8, 32], strides = [1, 1]} : vector<8x128xf32> to vector<8x32xf32>
    %102 = vector.extract_strided_slice %100 {offsets = [0, 32], sizes = [8, 32], strides = [1, 1]} : vector<8x128xf32> to vector<8x32xf32>
    %103 = vector.extract_strided_slice %100 {offsets = [0, 64], sizes = [8, 32], strides = [1, 1]} : vector<8x128xf32> to vector<8x32xf32>
    %cst_27 = arith.constant 2.000000e+00 : f32
    %104 = vector.broadcast %cst_27 : f32 to vector<8x32xf32>
    %105 = arith.mulf %104, %103 : vector<8x32xf32>
    %cst_28 = arith.constant 1.000000e+00 : f32
    %106 = vector.broadcast %cst_28 : f32 to vector<8x32xf32>
    %107 = arith.subf %105, %106 : vector<8x32xf32>
    %108 = vector.extract_strided_slice %100 {offsets = [0, 96], sizes = [8, 32], strides = [1, 1]} : vector<8x128xf32> to vector<8x32xf32>
    %109 = arith.mulf %102, %90 : vector<8x32xf32>
    %110 = arith.mulf %101, %107 : vector<8x32xf32>
    %111 = arith.addf %109, %110 : vector<8x32xf32>
    %112 = math.tanh %111 : vector<8x32xf32>
    %113 = arith.mulf %108, %112 : vector<8x32xf32>
    %114 = vector.extract_strided_slice %5 {offsets = [40, 0], sizes = [8, 128], strides = [1, 1]} : vector<64x128xf32> to vector<8x128xf32>
    %cst_29 = arith.constant dense<0.000000e+00> : vector<8x128xf32>
    %115 = tpu.matmul %113, %6, %cst_29 {dimension_numbers = #tpu.dot_dimension_numbers<[1], [0], [0], [1], [0, 0, 1, 1], [], []>} : vector<8x32xf32>, vector<32x128xf32>, vector<8x128xf32> -> vector<8x128xf32>
    %116 = arith.addf %114, %115 : vector<8x128xf32>
    %117 = arith.negf %116 : vector<8x128xf32>
    %118 = math.exp %117 : vector<8x128xf32>
    %cst_30 = arith.constant 1.000000e+00 : f32
    %119 = vector.broadcast %cst_30 : f32 to vector<8x128xf32>
    %120 = arith.addf %119, %118 : vector<8x128xf32>
    %121 = arith.divf %119, %120 : vector<8x128xf32>
    %122 = vector.extract_strided_slice %121 {offsets = [0, 0], sizes = [8, 32], strides = [1, 1]} : vector<8x128xf32> to vector<8x32xf32>
    %123 = vector.extract_strided_slice %121 {offsets = [0, 32], sizes = [8, 32], strides = [1, 1]} : vector<8x128xf32> to vector<8x32xf32>
    %124 = vector.extract_strided_slice %121 {offsets = [0, 64], sizes = [8, 32], strides = [1, 1]} : vector<8x128xf32> to vector<8x32xf32>
    %cst_31 = arith.constant 2.000000e+00 : f32
    %125 = vector.broadcast %cst_31 : f32 to vector<8x32xf32>
    %126 = arith.mulf %125, %124 : vector<8x32xf32>
    %cst_32 = arith.constant 1.000000e+00 : f32
    %127 = vector.broadcast %cst_32 : f32 to vector<8x32xf32>
    %128 = arith.subf %126, %127 : vector<8x32xf32>
    %129 = vector.extract_strided_slice %121 {offsets = [0, 96], sizes = [8, 32], strides = [1, 1]} : vector<8x128xf32> to vector<8x32xf32>
    %130 = arith.mulf %123, %111 : vector<8x32xf32>
    %131 = arith.mulf %122, %128 : vector<8x32xf32>
    %132 = arith.addf %130, %131 : vector<8x32xf32>
    %133 = math.tanh %132 : vector<8x32xf32>
    %134 = arith.mulf %129, %133 : vector<8x32xf32>
    %135 = vector.extract_strided_slice %5 {offsets = [48, 0], sizes = [8, 128], strides = [1, 1]} : vector<64x128xf32> to vector<8x128xf32>
    %cst_33 = arith.constant dense<0.000000e+00> : vector<8x128xf32>
    %136 = tpu.matmul %134, %6, %cst_33 {dimension_numbers = #tpu.dot_dimension_numbers<[1], [0], [0], [1], [0, 0, 1, 1], [], []>} : vector<8x32xf32>, vector<32x128xf32>, vector<8x128xf32> -> vector<8x128xf32>
    %137 = arith.addf %135, %136 : vector<8x128xf32>
    %138 = arith.negf %137 : vector<8x128xf32>
    %139 = math.exp %138 : vector<8x128xf32>
    %cst_34 = arith.constant 1.000000e+00 : f32
    %140 = vector.broadcast %cst_34 : f32 to vector<8x128xf32>
    %141 = arith.addf %140, %139 : vector<8x128xf32>
    %142 = arith.divf %140, %141 : vector<8x128xf32>
    %143 = vector.extract_strided_slice %142 {offsets = [0, 0], sizes = [8, 32], strides = [1, 1]} : vector<8x128xf32> to vector<8x32xf32>
    %144 = vector.extract_strided_slice %142 {offsets = [0, 32], sizes = [8, 32], strides = [1, 1]} : vector<8x128xf32> to vector<8x32xf32>
    %145 = vector.extract_strided_slice %142 {offsets = [0, 64], sizes = [8, 32], strides = [1, 1]} : vector<8x128xf32> to vector<8x32xf32>
    %cst_35 = arith.constant 2.000000e+00 : f32
    %146 = vector.broadcast %cst_35 : f32 to vector<8x32xf32>
    %147 = arith.mulf %146, %145 : vector<8x32xf32>
    %cst_36 = arith.constant 1.000000e+00 : f32
    %148 = vector.broadcast %cst_36 : f32 to vector<8x32xf32>
    %149 = arith.subf %147, %148 : vector<8x32xf32>
    %150 = vector.extract_strided_slice %142 {offsets = [0, 96], sizes = [8, 32], strides = [1, 1]} : vector<8x128xf32> to vector<8x32xf32>
    %151 = arith.mulf %144, %132 : vector<8x32xf32>
    %152 = arith.mulf %143, %149 : vector<8x32xf32>
    %153 = arith.addf %151, %152 : vector<8x32xf32>
    %154 = math.tanh %153 : vector<8x32xf32>
    %155 = arith.mulf %150, %154 : vector<8x32xf32>
    %156 = vector.extract_strided_slice %5 {offsets = [56, 0], sizes = [8, 128], strides = [1, 1]} : vector<64x128xf32> to vector<8x128xf32>
    %cst_37 = arith.constant dense<0.000000e+00> : vector<8x128xf32>
    %157 = tpu.matmul %155, %6, %cst_37 {dimension_numbers = #tpu.dot_dimension_numbers<[1], [0], [0], [1], [0, 0, 1, 1], [], []>} : vector<8x32xf32>, vector<32x128xf32>, vector<8x128xf32> -> vector<8x128xf32>
    %158 = arith.addf %156, %157 : vector<8x128xf32>
    %159 = arith.negf %158 : vector<8x128xf32>
    %160 = math.exp %159 : vector<8x128xf32>
    %cst_38 = arith.constant 1.000000e+00 : f32
    %161 = vector.broadcast %cst_38 : f32 to vector<8x128xf32>
    %162 = arith.addf %161, %160 : vector<8x128xf32>
    %163 = arith.divf %161, %162 : vector<8x128xf32>
    %164 = vector.extract_strided_slice %163 {offsets = [0, 0], sizes = [8, 32], strides = [1, 1]} : vector<8x128xf32> to vector<8x32xf32>
    %165 = vector.extract_strided_slice %163 {offsets = [0, 32], sizes = [8, 32], strides = [1, 1]} : vector<8x128xf32> to vector<8x32xf32>
    %166 = vector.extract_strided_slice %163 {offsets = [0, 64], sizes = [8, 32], strides = [1, 1]} : vector<8x128xf32> to vector<8x32xf32>
    %cst_39 = arith.constant 2.000000e+00 : f32
    %167 = vector.broadcast %cst_39 : f32 to vector<8x32xf32>
    %168 = arith.mulf %167, %166 : vector<8x32xf32>
    %cst_40 = arith.constant 1.000000e+00 : f32
    %169 = vector.broadcast %cst_40 : f32 to vector<8x32xf32>
    %170 = arith.subf %168, %169 : vector<8x32xf32>
    %171 = vector.extract_strided_slice %163 {offsets = [0, 96], sizes = [8, 32], strides = [1, 1]} : vector<8x128xf32> to vector<8x32xf32>
    %172 = arith.mulf %165, %153 : vector<8x32xf32>
    %173 = arith.mulf %164, %170 : vector<8x32xf32>
    %174 = arith.addf %172, %173 : vector<8x32xf32>
    %175 = math.tanh %174 : vector<8x32xf32>
    %176 = arith.mulf %171, %175 : vector<8x32xf32>
    %c0_41 = arith.constant 0 : index
    %c0_42 = arith.constant 0 : index
    %177 = vector.load %arg4[%c0_41, %c0_42] : memref<32x8xf32, #tpu.memory_space<vmem>>, vector<32x8xf32>
    %cst_43 = arith.constant dense<0.000000e+00> : vector<8x8xf32>
    %178 = tpu.matmul %176, %177, %cst_43 {dimension_numbers = #tpu.dot_dimension_numbers<[1], [0], [0], [1], [0, 0, 1, 1], [], []>} : vector<8x32xf32>, vector<32x8xf32>, vector<8x8xf32> -> vector<8x8xf32>
    %c0_44 = arith.constant 0 : index
    %c0_45 = arith.constant 0 : index
    %179 = vector.load %arg5[%c0_44, %c0_45] : memref<8x8xf32, #tpu.memory_space<vmem>>, vector<8x8xf32>
    tpu.vector_store %arg5[%c0_44, %c0_45], %178 {strides = array<i32>} : memref<8x8xf32, #tpu.memory_space<vmem>>, vector<8x8xf32>,
    return
  }
}

</mosaic_0001>

<llo_original>
// kernel: tpu_custom_call.1
$region0: #{tpu_custom_call.1}
  #allocation0 [shape = 'u32[]', space=smem, size = 0x4, offset = 0x4, fixed_abs, tag = 'smem constant byte address 0x4 - core index']
  #allocation1 [shape = 'u32[144,128]{1,0:T(1,128)}', space=vmem, size = 0x12000, scoped, tag = 'internal scratch']
  %s0 = inlined_call_operand.vmem [shape: f32[64,16], index: 0, kind: input, shape index: {}]
  %s1 = inlined_call_operand.vmem [shape: f32[16,128], index: 1, kind: input, shape index: {}]
  %s2 = inlined_call_operand.vmem [shape: f32[32,128], index: 2, kind: input, shape index: {}]
  %s3 = inlined_call_operand.vmem [shape: f32[1,128], index: 3, kind: input, shape index: {}]
  %s4 = inlined_call_operand.vmem [shape: f32[32,8], index: 4, kind: input, shape index: {}]
  %s5 = inlined_call_operand.hbm [shape: f32[8,8], index: 5, kind: output, shape index: {}]
  %s6 = sld [smem:[#allocation0]]
  $region30: #{tpu_custom_call.1} parent=0
    _
  %s8 = ssub.s32 1, %s6
  %s9 = scalar_select 0, %s8, %s6
  $region1: #{tpu_custom_call.1} parent=0
    #allocation2 [shape = 'u8[4096]{0}', space=vmem, size = 0x1000, scoped, tag = 'output window, operand 0, single buffered']
    #allocation3 [shape = 's32[1]{0}', space=sflag, size = 0x4, scoped, tag = 'scoped memory for tpu_custom_call.1']
    %10 = vsyncpa [#allocation3], 0
    // Predicated region
    $region2: #{tpu_custom_call.1} parent=1 // pred_check
      _
    $region3: #{tpu_custom_call.1} parent=1 // pred_check_branch
      %12 = sbr.rel (0) target = $region5
    $region4: #{tpu_custom_call.1} parent=1 // pred_region
      _
    $region5: #{tpu_custom_call.1} parent=1 // pred_fallthru
      _
    // Predicated region
    $region6: #{tpu_custom_call.1} parent=1 // pred_check
      _
    $region7: #{tpu_custom_call.1} parent=1 // pred_check_branch
      %14 = sbr.rel (0) target = $region9
    $region8: #{tpu_custom_call.1} parent=1 // pred_region
      _
    $region9: #{tpu_custom_call.1} parent=1 // pred_fallthru
      _
    // Predicated region
    $region10: #{tpu_custom_call.1} parent=1 // pred_check
      _
    $region11: #{tpu_custom_call.1} parent=1 // pred_check_branch
      %16 = sbr.rel (0) target = $region13
    $region12: #{tpu_custom_call.1} parent=1 // pred_region
      _
    $region13: #{tpu_custom_call.1} parent=1 // pred_fallthru
      _
    // Predicated region
    $region14: #{tpu_custom_call.1} parent=1 // pred_check
      _
    $region15: #{tpu_custom_call.1} parent=1 // pred_check_branch
      %18 = sbr.rel (0) target = $region17
    $region16: #{tpu_custom_call.1} parent=1 // pred_region
      _
    $region17: #{tpu_custom_call.1} parent=1 // pred_fallthru
      _
    // Predicated region
    $region18: #{tpu_custom_call.1} parent=1 // pred_check
      _
    $region19: #{tpu_custom_call.1} parent=1 // pred_check_branch
      %20 = sbr.rel (0) target = $region21
    $region20: #{tpu_custom_call.1} parent=1 // pred_region
      _
    $region21: #{tpu_custom_call.1} parent=1 // pred_fallthru
      _
    %v21 = vld [vmem:[%s0] sm:$0xff]
    %v22 = vld [vmem:[%s0 + $0x8] sm:$0xff]
    %v23 = vld [vmem:[%s0 + $0x10] sm:$0xff]
    %v24 = vld [vmem:[%s0 + $0x18] sm:$0xff]
    %v25 = vld [vmem:[%s0 + $0x20] sm:$0xff]
    %v26 = vld [vmem:[%s0 + $0x28] sm:$0xff]
    %v27 = vld [vmem:[%s0 + $0x30] sm:$0xff]
    %v28 = vld [vmem:[%s0 + $0x38] sm:$0xff]
    %v29 = vld [vmem:[%s1] sm:$0xff]
    %v30 = vld [vmem:[%s1 + $0x8] sm:$0xff]
    %v31 = vld [vmem:[%s3] sm:$0x1]
    %v33 = vlaneseq
    %v34 = vshrl.u32 %v33, 7
    %v35 = vsub.s32 0, %v34
    %v36 = vrot.slane %v31, %v35
    %vm38 = vcmask 130048
    %v40 = vsel %vm38, %v21, 0
    %v43 = vsel %vm38, %v22, 0
    %v46 = vsel %vm38, %v23, 0
    %v49 = vsel %vm38, %v24, 0
    %v52 = vsel %vm38, %v25, 0
    %v55 = vsel %vm38, %v26, 0
    %v58 = vsel %vm38, %v27, 0
    %v61 = vsel %vm38, %v28, 0
    %63 = vmatprep.subr.mxu0 0.0
    %64 = vmatpush1.msra.mxu0 %v29
    %65 = vmatprep.subr.mxu0 0.0
    %66 = vmatpush1.msra.mxu0 %v30
    %67 = vmatprep.subr.mxu0 0.0
    %68 = vmatpush1.msra.mxu0 0.0
    %69 = vmatprep.subr.mxu0 0.0
    %70 = vmatpush1.msra.mxu0 0.0
    %71 = vmatprep.subr.mxu0 0.0
    %72 = vmatpush1.msra.mxu0 0.0
    %73 = vmatprep.subr.mxu0 0.0
    %74 = vmatpush1.msra.mxu0 0.0
    %75 = vmatprep.subr.mxu0 0.0
    %76 = vmatpush1.msra.mxu0 0.0
    %77 = vmatprep.subr.mxu0 0.0
    %78 = vmatpush1.msra.mxu0 0.0
    %79 = vmatprep.subr.mxu0 0.0
    %80 = vmatpush1.msra.mxu0 0.0
    %81 = vmatprep.subr.mxu0 0.0
    %82 = vmatpush1.msra.mxu0 0.0
    %83 = vmatprep.subr.mxu0 0.0
    %84 = vmatpush1.msra.mxu0 0.0
    %85 = vmatprep.subr.mxu0 0.0
    %86 = vmatpush1.msra.mxu0 0.0
    %87 = vmatprep.subr.mxu0 0.0
    %88 = vmatpush1.msra.mxu0 0.0
    %89 = vmatprep.subr.mxu0 0.0
    %90 = vmatpush1.msra.mxu0 0.0
    %91 = vmatprep.subr.mxu0 0.0
    %92 = vmatpush1.msra.mxu0 0.0
    %93 = vmatprep.subr.mxu0 0.0
    %94 = vmatpush1.msra.mxu0 0.0
    %95 = vmatprep.subr.mxu0 0.0
    %96 = vmatpush1.msra.mxu0 0.0
    %97 = vmatprep.subr.mxu0 0.0
    %98 = vmatpush1.msra.mxu0 0.0
    %99 = vmatprep.subr.mxu0 0.0
    %100 = vmatpush1.msra.mxu0 0.0
    %101 = vmatprep.subr.mxu0 0.0
    %102 = vmatpush1.msra.mxu0 0.0
    %103 = vmatprep.subr.mxu0 0.0
    %104 = vmatpush1.msra.mxu0 0.0
    %105 = vmatprep.subr.mxu0 0.0
    %106 = vmatpush1.msra.mxu0 0.0
    %107 = vmatprep.subr.mxu0 0.0
    %108 = vmatpush1.msra.mxu0 0.0
    %109 = vmatprep.subr.mxu0 0.0
    %110 = vmatpush1.msra.mxu0 0.0
    %111 = vmatprep.subr.mxu0 0.0
    %112 = vmatpush1.msra.mxu0 0.0
    %113 = vmatprep.subr.mxu0 0.0
    %114 = vmatpush1.msra.mxu0 0.0
    %115 = vmatprep.subr.mxu0 0.0
    %116 = vmatpush1.msra.mxu0 0.0
    %117 = vmatprep.subr.mxu0 0.0
    %118 = vmatpush1.msra.mxu0 0.0
    %119 = vmatprep.subr.mxu0 0.0
    %120 = vmatpush1.msra.mxu0 0.0
    %121 = vmatprep.subr.mxu0 0.0
    %122 = vmatpush1.msra.mxu0 0.0
    %123 = vmatprep.subr.mxu0 0.0
    %124 = vmatpush1.msra.mxu0 0.0
    %125 = vmatprep.subr.mxu0 0.0
    %126 = vmatpush1.msra.mxu0 0.0
    %127 = vmatprep.mubr.f32.mxu0 0.0
    %128 = vmatmul.mubr.f32.gmra.mrb[0].mxu0 %v40
    %v129 = vpop.f32.mrb[0].mxu0
    %v130 = vadd.f32 %v36, %v129
    %v131 = vpop.f32.mrb[0].mxu0
    %132 = vmatprep.mubr.f32.mxu0 0.0
    %133 = vmatmul.mubr.f32.gmra.mrb[0].mxu0 %v43
    %v134 = vpop.f32.mrb[0].mxu0
    %v135 = vadd.f32 %v36, %v134
    %v136 = vpop.f32.mrb[0].mxu0
    %137 = vmatprep.mubr.f32.mxu0 0.0
    %138 = vmatmul.mubr.f32.gmra.mrb[0].mxu0 %v46
    %v139 = vpop.f32.mrb[0].mxu0
    %v140 = vadd.f32 %v36, %v139
    %v141 = vpop.f32.mrb[0].mxu0
    %142 = vmatprep.mubr.f32.mxu0 0.0
    %143 = vmatmul.mubr.f32.gmra.mrb[0].mxu0 %v49
    %v144 = vpop.f32.mrb[0].mxu0
    %v145 = vadd.f32 %v36, %v144
    %v146 = vpop.f32.mrb[0].mxu0
    %147 = vmatprep.mubr.f32.mxu0 0.0
    %148 = vmatmul.mubr.f32.gmra.mrb[0].mxu0 %v52
    %v149 = vpop.f32.mrb[0].mxu0
    %v150 = vadd.f32 %v36, %v149
    %v151 = vpop.f32.mrb[0].mxu0
    %152 = vmatprep.mubr.f32.mxu0 0.0
    %153 = vmatmul.mubr.f32.gmra.mrb[0].mxu0 %v55
    %v154 = vpop.f32.mrb[0].mxu0
    %v155 = vadd.f32 %v36, %v154
    %v156 = vpop.f32.mrb[0].mxu0
    %157 = vmatprep.mubr.f32.mxu0 0.0
    %158 = vmatmul.mubr.f32.gmra.mrb[0].mxu0 %v58
    %v159 = vpop.f32.mrb[0].mxu0
    %v160 = vadd.f32 %v36, %v159
    %v161 = vpop.f32.mrb[0].mxu0
    %162 = vmatprep.mubr.f32.mxu0 0.0
    %163 = vmatmul.mubr.f32.gmra.mrb[0].mxu0 %v61
    %v164 = vpop.f32.mrb[0].mxu0
    %v165 = vadd.f32 %v36, %v164
    %v166 = vpop.f32.mrb[0].mxu0
    %167 = vdwg.mxu0
    %v168 = vld [vmem:[%s2] sm:$0xff]
    %v169 = vld [vmem:[%s2 + $0x8] sm:$0xff]
    %v170 = vld [vmem:[%s2 + $0x10] sm:$0xff]
    %v171 = vld [vmem:[%s2 + $0x18] sm:$0xff]
    %vm172 = vcmask 261120
    %v174 = vsel %vm172, 0.0, 0
    %176 = vmatprep.subr.mxu0 0.0
    %177 = vmatpush1.msra.mxu0 %v168
    %178 = vmatprep.subr.mxu0 0.0
    %179 = vmatpush1.msra.mxu0 %v169
    %180 = vmatprep.subr.mxu0 0.0
    %181 = vmatpush1.msra.mxu0 %v170
    %182 = vmatprep.subr.mxu0 0.0
    %183 = vmatpush1.msra.mxu0 %v171
    %184 = vmatprep.subr.mxu0 0.0
    %185 = vmatpush1.msra.mxu0 0.0
    %186 = vmatprep.subr.mxu0 0.0
    %187 = vmatpush1.msra.mxu0 0.0
    %188 = vmatprep.subr.mxu0 0.0
    %189 = vmatpush1.msra.mxu0 0.0
    %190 = vmatprep.subr.mxu0 0.0
    %191 = vmatpush1.msra.mxu0 0.0
    %192 = vmatprep.subr.mxu0 0.0
    %193 = vmatpush1.msra.mxu0 0.0
    %194 = vmatprep.subr.mxu0 0.0
    %195 = vmatpush1.msra.mxu0 0.0
    %196 = vmatprep.subr.mxu0 0.0
    %197 = vmatpush1.msra.mxu0 0.0
    %198 = vmatprep.subr.mxu0 0.0
    %199 = vmatpush1.msra.mxu0 0.0
    %200 = vmatprep.subr.mxu0 0.0
    %201 = vmatpush1.msra.mxu0 0.0
    %202 = vmatprep.subr.mxu0 0.0
    %203 = vmatpush1.msra.mxu0 0.0
    %204 = vmatprep.subr.mxu0 0.0
    %205 = vmatpush1.msra.mxu0 0.0
    %206 = vmatprep.subr.mxu0 0.0
    %207 = vmatpush1.msra.mxu0 0.0
    %208 = vmatprep.subr.mxu0 0.0
    %209 = vmatpush1.msra.mxu0 0.0
    %210 = vmatprep.subr.mxu0 0.0
    %211 = vmatpush1.msra.mxu0 0.0
    %212 = vmatprep.subr.mxu0 0.0
    %213 = vmatpush1.msra.mxu0 0.0
    %214 = vmatprep.subr.mxu0 0.0
    %215 = vmatpush1.msra.mxu0 0.0
    %216 = vmatprep.subr.mxu0 0.0
    %217 = vmatpush1.msra.mxu0 0.0
    %218 = vmatprep.subr.mxu0 0.0
    %219 = vmatpush1.msra.mxu0 0.0
    %220 = vmatprep.subr.mxu0 0.0
    %221 = vmatpush1.msra.mxu0 0.0
    %222 = vmatprep.subr.mxu0 0.0
    %223 = vmatpush1.msra.mxu0 0.0
    %224 = vmatprep.subr.mxu0 0.0
    %225 = vmatpush1.msra.mxu0 0.0
    %226 = vmatprep.subr.mxu0 0.0
    %227 = vmatpush1.msra.mxu0 0.0
    %228 = vmatprep.subr.mxu0 0.0
    %229 = vmatpush1.msra.mxu0 0.0
    %230 = vmatprep.subr.mxu0 0.0
    %231 = vmatpush1.msra.mxu0 0.0
    %232 = vmatprep.subr.mxu0 0.0
    %233 = vmatpush1.msra.mxu0 0.0
    %234 = vmatprep.subr.mxu0 0.0
    %235 = vmatpush1.msra.mxu0 0.0
    %236 = vmatprep.subr.mxu0 0.0
    %237 = vmatpush1.msra.mxu0 0.0
    %238 = vmatprep.subr.mxu0 0.0
    %239 = vmatpush1.msra.mxu0 0.0
    %240 = vmatprep.mubr.f32.mxu0 0.0
    %241 = vmatmul.mubr.f32.gmra.mrb[0].mxu0 %v174
    %v242 = vpop.f32.mrb[0].mxu0
    %v243 = vadd.f32 0.0, %v242
    %v244 = vpop.f32.mrb[0].mxu0
    %245 = vdwg.mxu0
    %v246 = vadd.f32 %v130, %v243
    %v247 = vxor.u32 %v246, 2147483648
    %v248 = vmul.f32 %v247, 1.442695
    %v249 = vpow.pop %v248
    %v250 = vadd.f32 %v249, 1.0
    %v251 = vrcp.pop %v250
    %v252 = vmul.f32 1.0, %v251
    %v253 = vmul.f32 %v252, 2.0
    %v254 = vsub.f32 %v253, 1.0
    %v255 = vmul.f32 %v252, 0.0
    %257 = vrot.lane.b32.xlu0 %v254, 64
    %v258 = vpop.permute.xlu0 %257
    %v260 = vmul.f32 %v252, %v258
    %262 = vrot.lane.b32.xlu0 %v260, 32
    %v263 = vpop.permute.xlu0 %262
    %v265 = vadd.f32 %v255, %v263
    %v266 = vtanh.pop %v265
    %268 = vrot.lane.b32.xlu0 %v266, 64
    %v269 = vpop.permute.xlu0 %268
    %v271 = vmul.f32 %v252, %v269
    %273 = vrot.lane.b32.xlu0 %v271, 32
    %v274 = vpop.permute.xlu0 %273
    %v275 = vsel %vm172, %v274, 0
    %277 = vmatprep.subr.mxu0 0.0
    %278 = vmatpush1.msra.mxu0 %v168
    %279 = vmatprep.subr.mxu0 0.0
    %280 = vmatpush1.msra.mxu0 %v169
    %281 = vmatprep.subr.mxu0 0.0
    %282 = vmatpush1.msra.mxu0 %v170
    %283 = vmatprep.subr.mxu0 0.0
    %284 = vmatpush1.msra.mxu0 %v171
    %285 = vmatprep.subr.mxu0 0.0
    %286 = vmatpush1.msra.mxu0 0.0
    %287 = vmatprep.subr.mxu0 0.0
    %288 = vmatpush1.msra.mxu0 0.0
    %289 = vmatprep.subr.mxu0 0.0
    %290 = vmatpush1.msra.mxu0 0.0
    %291 = vmatprep.subr.mxu0 0.0
    %292 = vmatpush1.msra.mxu0 0.0
    %293 = vmatprep.subr.mxu0 0.0
    %294 = vmatpush1.msra.mxu0 0.0
    %295 = vmatprep.subr.mxu0 0.0
    %296 = vmatpush1.msra.mxu0 0.0
    %297 = vmatprep.subr.mxu0 0.0
    %298 = vmatpush1.msra.mxu0 0.0
    %299 = vmatprep.subr.mxu0 0.0
    %300 = vmatpush1.msra.mxu0 0.0
    %301 = vmatprep.subr.mxu0 0.0
    %302 = vmatpush1.msra.mxu0 0.0
    %303 = vmatprep.subr.mxu0 0.0
    %304 = vmatpush1.msra.mxu0 0.0
    %305 = vmatprep.subr.mxu0 0.0
    %306 = vmatpush1.msra.mxu0 0.0
    %307 = vmatprep.subr.mxu0 0.0
    %308 = vmatpush1.msra.mxu0 0.0
    %309 = vmatprep.subr.mxu0 0.0
    %310 = vmatpush1.msra.mxu0 0.0
    %311 = vmatprep.subr.mxu0 0.0
    %312 = vmatpush1.msra.mxu0 0.0
    %313 = vmatprep.subr.mxu0 0.0
    %314 = vmatpush1.msra.mxu0 0.0
    %315 = vmatprep.subr.mxu0 0.0
    %316 = vmatpush1.msra.mxu0 0.0
    %317 = vmatprep.subr.mxu0 0.0
    %318 = vmatpush1.msra.mxu0 0.0
    %319 = vmatprep.subr.mxu0 0.0
    %320 = vmatpush1.msra.mxu0 0.0
    %321 = vmatprep.subr.mxu0 0.0
    %322 = vmatpush1.msra.mxu0 0.0
    %323 = vmatprep.subr.mxu0 0.0
    %324 = vmatpush1.msra.mxu0 0.0
    %325 = vmatprep.subr.mxu0 0.0
    %326 = vmatpush1.msra.mxu0 0.0
    %327 = vmatprep.subr.mxu0 0.0
    %328 = vmatpush1.msra.mxu0 0.0
    %329 = vmatprep.subr.mxu0 0.0
    %330 = vmatpush1.msra.mxu0 0.0
    %331 = vmatprep.subr.mxu0 0.0
    %332 = vmatpush1.msra.mxu0 0.0
    %333 = vmatprep.subr.mxu0 0.0
    %334 = vmatpush1.msra.mxu0 0.0
    %335 = vmatprep.subr.mxu0 0.0
    %336 = vmatpush1.msra.mxu0 0.0
    %337 = vmatprep.subr.mxu0 0.0
    %338 = vmatpush1.msra.mxu0 0.0
    %339 = vmatprep.subr.mxu0 0.0
    %340 = vmatpush1.msra.mxu0 0.0
    %341 = vmatprep.mubr.f32.mxu0 0.0
    %342 = vmatmul.mubr.f32.gmra.mrb[0].mxu0 %v275
    %v343 = vpop.f32.mrb[0].mxu0
    %v344 = vadd.f32 0.0, %v343
    %v345 = vpop.f32.mrb[0].mxu0
    %346 = vdwg.mxu0
    %v347 = vadd.f32 %v135, %v344
    %v348 = vxor.u32 %v347, 2147483648
    %v349 = vmul.f32 %v348, 1.442695
    %v350 = vpow.pop %v349
    %v351 = vadd.f32 %v350, 1.0
    %v352 = vrcp.pop %v351
    %v353 = vmul.f32 1.0, %v352
    %v354 = vmul.f32 %v353, 2.0
    %v355 = vsub.f32 %v354, 1.0
    %v356 = vmul.f32 %v353, %v265
    %358 = vrot.lane.b32.xlu0 %v355, 64
    %v359 = vpop.permute.xlu0 %358
    %v361 = vmul.f32 %v353, %v359
    %363 = vrot.lane.b32.xlu0 %v361, 32
    %v364 = vpop.permute.xlu0 %363
    %v366 = vadd.f32 %v356, %v364
    %v367 = vtanh.pop %v366
    %369 = vrot.lane.b32.xlu0 %v367, 64
    %v370 = vpop.permute.xlu0 %369
    %v372 = vmul.f32 %v353, %v370
    %374 = vrot.lane.b32.xlu0 %v372, 32
    %v375 = vpop.permute.xlu0 %374
    %v376 = vsel %vm172, %v375, 0
    %378 = vmatprep.subr.mxu0 0.0
    %379 = vmatpush1.msra.mxu0 %v168
    %380 = vmatprep.subr.mxu0 0.0
    %381 = vmatpush1.msra.mxu0 %v169
    %382 = vmatprep.subr.mxu0 0.0
    %383 = vmatpush1.msra.mxu0 %v170
    %384 = vmatprep.subr.mxu0 0.0
    %385 = vmatpush1.msra.mxu0 %v171
    %386 = vmatprep.subr.mxu0 0.0
    %387 = vmatpush1.msra.mxu0 0.0
    %388 = vmatprep.subr.mxu0 0.0
    %389 = vmatpush1.msra.mxu0 0.0
    %390 = vmatprep.subr.mxu0 0.0
    %391 = vmatpush1.msra.mxu0 0.0
    %392 = vmatprep.subr.mxu0 0.0
    %393 = vmatpush1.msra.mxu0 0.0
    %394 = vmatprep.subr.mxu0 0.0
    %395 = vmatpush1.msra.mxu0 0.0
    %396 = vmatprep.subr.mxu0 0.0
    %397 = vmatpush1.msra.mxu0 0.0
    %398 = vmatprep.subr.mxu0 0.0
    %399 = vmatpush1.msra.mxu0 0.0
    %400 = vmatprep.subr.mxu0 0.0
    %401 = vmatpush1.msra.mxu0 0.0
    %402 = vmatprep.subr.mxu0 0.0
    %403 = vmatpush1.msra.mxu0 0.0
    %404 = vmatprep.subr.mxu0 0.0
    %405 = vmatpush1.msra.mxu0 0.0
    %406 = vmatprep.subr.mxu0 0.0
    %407 = vmatpush1.msra.mxu0 0.0
    %408 = vmatprep.subr.mxu0 0.0
    %409 = vmatpush1.msra.mxu0 0.0
    %410 = vmatprep.subr.mxu0 0.0
    %411 = vmatpush1.msra.mxu0 0.0
    %412 = vmatprep.subr.mxu0 0.0
    %413 = vmatpush1.msra.mxu0 0.0
    %414 = vmatprep.subr.mxu0 0.0
    %415 = vmatpush1.msra.mxu0 0.0
    %416 = vmatprep.subr.mxu0 0.0
    %417 = vmatpush1.msra.mxu0 0.0
    %418 = vmatprep.subr.mxu0 0.0
    %419 = vmatpush1.msra.mxu0 0.0
    %420 = vmatprep.subr.mxu0 0.0
    %421 = vmatpush1.msra.mxu0 0.0
    %422 = vmatprep.subr.mxu0 0.0
    %423 = vmatpush1.msra.mxu0 0.0
    %424 = vmatprep.subr.mxu0 0.0
    %425 = vmatpush1.msra.mxu0 0.0
    %426 = vmatprep.subr.mxu0 0.0
    %427 = vmatpush1.msra.mxu0 0.0
    %428 = vmatprep.subr.mxu0 0.0
    %429 = vmatpush1.msra.mxu0 0.0
    %430 = vmatprep.subr.mxu0 0.0
    %431 = vmatpush1.msra.mxu0 0.0
    %432 = vmatprep.subr.mxu0 0.0
    %433 = vmatpush1.msra.mxu0 0.0
    %434 = vmatprep.subr.mxu0 0.0
    %435 = vmatpush1.msra.mxu0 0.0
    %436 = vmatprep.subr.mxu0 0.0
    %437 = vmatpush1.msra.mxu0 0.0
    %438 = vmatprep.subr.mxu0 0.0
    %439 = vmatpush1.msra.mxu0 0.0
    %440 = vmatprep.subr.mxu0 0.0
    %441 = vmatpush1.msra.mxu0 0.0
    %442 = vmatprep.mubr.f32.mxu0 0.0
    %443 = vmatmul.mubr.f32.gmra.mrb[0].mxu0 %v376
    %v444 = vpop.f32.mrb[0].mxu0
    %v445 = vadd.f32 0.0, %v444
    %v446 = vpop.f32.mrb[0].mxu0
    %447 = vdwg.mxu0
    %v448 = vadd.f32 %v140, %v445
    %v449 = vxor.u32 %v448, 2147483648
    %v450 = vmul.f32 %v449, 1.442695
    %v451 = vpow.pop %v450
    %v452 = vadd.f32 %v451, 1.0
    %v453 = vrcp.pop %v452
    %v454 = vmul.f32 1.0, %v453
    %v455 = vmul.f32 %v454, 2.0
    %v456 = vsub.f32 %v455, 1.0
    %v457 = vmul.f32 %v454, %v366
    %459 = vrot.lane.b32.xlu0 %v456, 64
    %v460 = vpop.permute.xlu0 %459
    %v462 = vmul.f32 %v454, %v460
    %464 = vrot.lane.b32.xlu0 %v462, 32
    %v465 = vpop.permute.xlu0 %464
    %v467 = vadd.f32 %v457, %v465
    %v468 = vtanh.pop %v467
    %470 = vrot.lane.b32.xlu0 %v468, 64
    %v471 = vpop.permute.xlu0 %470
    %v473 = vmul.f32 %v454, %v471
    %475 = vrot.lane.b32.xlu0 %v473, 32
    %v476 = vpop.permute.xlu0 %475
    %v477 = vsel %vm172, %v476, 0
    %479 = vmatprep.subr.mxu0 0.0
    %480 = vmatpush1.msra.mxu0 %v168
    %481 = vmatprep.subr.mxu0 0.0
    %482 = vmatpush1.msra.mxu0 %v169
    %483 = vmatprep.subr.mxu0 0.0
    %484 = vmatpush1.msra.mxu0 %v170
    %485 = vmatprep.subr.mxu0 0.0
    %486 = vmatpush1.msra.mxu0 %v171
    %487 = vmatprep.subr.mxu0 0.0
    %488 = vmatpush1.msra.mxu0 0.0
    %489 = vmatprep.subr.mxu0 0.0
    %490 = vmatpush1.msra.mxu0 0.0
    %491 = vmatprep.subr.mxu0 0.0
    %492 = vmatpush1.msra.mxu0 0.0
    %493 = vmatprep.subr.mxu0 0.0
    %494 = vmatpush1.msra.mxu0 0.0
    %495 = vmatprep.subr.mxu0 0.0
    %496 = vmatpush1.msra.mxu0 0.0
    %497 = vmatprep.subr.mxu0 0.0
    %498 = vmatpush1.msra.mxu0 0.0
    %499 = vmatprep.subr.mxu0 0.0
    %500 = vmatpush1.msra.mxu0 0.0
    %501 = vmatprep.subr.mxu0 0.0
    %502 = vmatpush1.msra.mxu0 0.0
    %503 = vmatprep.subr.mxu0 0.0
    %504 = vmatpush1.msra.mxu0 0.0
    %505 = vmatprep.subr.mxu0 0.0
    %506 = vmatpush1.msra.mxu0 0.0
    %507 = vmatprep.subr.mxu0 0.0
    %508 = vmatpush1.msra.mxu0 0.0
    %509 = vmatprep.subr.mxu0 0.0
    %510 = vmatpush1.msra.mxu0 0.0
    %511 = vmatprep.subr.mxu0 0.0
    %512 = vmatpush1.msra.mxu0 0.0
    %513 = vmatprep.subr.mxu0 0.0
    %514 = vmatpush1.msra.mxu0 0.0
    %515 = vmatprep.subr.mxu0 0.0
    %516 = vmatpush1.msra.mxu0 0.0
    %517 = vmatprep.subr.mxu0 0.0
    %518 = vmatpush1.msra.mxu0 0.0
    %519 = vmatprep.subr.mxu0 0.0
    %520 = vmatpush1.msra.mxu0 0.0
    %521 = vmatprep.subr.mxu0 0.0
    %522 = vmatpush1.msra.mxu0 0.0
    %523 = vmatprep.subr.mxu0 0.0
    %524 = vmatpush1.msra.mxu0 0.0
    %525 = vmatprep.subr.mxu0 0.0
    %526 = vmatpush1.msra.mxu0 0.0
    %527 = vmatprep.subr.mxu0 0.0
    %528 = vmatpush1.msra.mxu0 0.0
    %529 = vmatprep.subr.mxu0 0.0
    %530 = vmatpush1.msra.mxu0 0.0
    %531 = vmatprep.subr.mxu0 0.0
    %532 = vmatpush1.msra.mxu0 0.0
    %533 = vmatprep.subr.mxu0 0.0
    %534 = vmatpush1.msra.mxu0 0.0
    %535 = vmatprep.subr.mxu0 0.0
    %536 = vmatpush1.msra.mxu0 0.0
    %537 = vmatprep.subr.mxu0 0.0
    %538 = vmatpush1.msra.mxu0 0.0
    %539 = vmatprep.subr.mxu0 0.0
    %540 = vmatpush1.msra.mxu0 0.0
    %541 = vmatprep.subr.mxu0 0.0
    %542 = vmatpush1.msra.mxu0 0.0
    %543 = vmatprep.mubr.f32.mxu0 0.0
    %544 = vmatmul.mubr.f32.gmra.mrb[0].mxu0 %v477
    %v545 = vpop.f32.mrb[0].mxu0
    %v546 = vadd.f32 0.0, %v545
    %v547 = vpop.f32.mrb[0].mxu0
    %548 = vdwg.mxu0
    %v549 = vadd.f32 %v145, %v546
    %v550 = vxor.u32 %v549, 2147483648
    %v551 = vmul.f32 %v550, 1.442695
    %v552 = vpow.pop %v551
    %v553 = vadd.f32 %v552, 1.0
    %v554 = vrcp.pop %v553
    %v555 = vmul.f32 1.0, %v554
    %v556 = vmul.f32 %v555, 2.0
    %v557 = vsub.f32 %v556, 1.0
    %v558 = vmul.f32 %v555, %v467
    %560 = vrot.lane.b32.xlu0 %v557, 64
    %v561 = vpop.permute.xlu0 %560
    %v563 = vmul.f32 %v555, %v561
    %565 = vrot.lane.b32.xlu0 %v563, 32
    %v566 = vpop.permute.xlu0 %565
    %v568 = vadd.f32 %v558, %v566
    %v569 = vtanh.pop %v568
    %571 = vrot.lane.b32.xlu0 %v569, 64
    %v572 = vpop.permute.xlu0 %571
    %v574 = vmul.f32 %v555, %v572
    %576 = vrot.lane.b32.xlu0 %v574, 32
    %v577 = vpop.permute.xlu0 %576
    %v578 = vsel %vm172, %v577, 0
    %580 = vmatprep.subr.mxu0 0.0
    %581 = vmatpush1.msra.mxu0 %v168
    %582 = vmatprep.subr.mxu0 0.0
    %583 = vmatpush1.msra.mxu0 %v169
    %584 = vmatprep.subr.mxu0 0.0
    %585 = vmatpush1.msra.mxu0 %v170
    %586 = vmatprep.subr.mxu0 0.0
    %587 = vmatpush1.msra.mxu0 %v171
    %588 = vmatprep.subr.mxu0 0.0
    %589 = vmatpush1.msra.mxu0 0.0
    %590 = vmatprep.subr.mxu0 0.0
    %591 = vmatpush1.msra.mxu0 0.0
    %592 = vmatprep.subr.mxu0 0.0
    %593 = vmatpush1.msra.mxu0 0.0
    %594 = vmatprep.subr.mxu0 0.0
    %595 = vmatpush1.msra.mxu0 0.0
    %596 = vmatprep.subr.mxu0 0.0
    %597 = vmatpush1.msra.mxu0 0.0
    %598 = vmatprep.subr.mxu0 0.0
    %599 = vmatpush1.msra.mxu0 0.0
    %600 = vmatprep.subr.mxu0 0.0
    %601 = vmatpush1.msra.mxu0 0.0
    %602 = vmatprep.subr.mxu0 0.0
    %603 = vmatpush1.msra.mxu0 0.0
    %604 = vmatprep.subr.mxu0 0.0
    %605 = vmatpush1.msra.mxu0 0.0
    %606 = vmatprep.subr.mxu0 0.0
    %607 = vmatpush1.msra.mxu0 0.0
    %608 = vmatprep.subr.mxu0 0.0
    %609 = vmatpush1.msra.mxu0 0.0
    %610 = vmatprep.subr.mxu0 0.0
    %611 = vmatpush1.msra.mxu0 0.0
    %612 = vmatprep.subr.mxu0 0.0
    %613 = vmatpush1.msra.mxu0 0.0
    %614 = vmatprep.subr.mxu0 0.0
    %615 = vmatpush1.msra.mxu0 0.0
    %616 = vmatprep.subr.mxu0 0.0
    %617 = vmatpush1.msra.mxu0 0.0
    %618 = vmatprep.subr.mxu0 0.0
    %619 = vmatpush1.msra.mxu0 0.0
    %620 = vmatprep.subr.mxu0 0.0
    %621 = vmatpush1.msra.mxu0 0.0
    %622 = vmatprep.subr.mxu0 0.0
    %623 = vmatpush1.msra.mxu0 0.0
    %624 = vmatprep.subr.mxu0 0.0
    %625 = vmatpush1.msra.mxu0 0.0
    %626 = vmatprep.subr.mxu0 0.0
    %627 = vmatpush1.msra.mxu0 0.0
    %628 = vmatprep.subr.mxu0 0.0
    %629 = vmatpush1.msra.mxu0 0.0
    %630 = vmatprep.subr.mxu0 0.0
    %631 = vmatpush1.msra.mxu0 0.0
    %632 = vmatprep.subr.mxu0 0.0
    %633 = vmatpush1.msra.mxu0 0.0
    %634 = vmatprep.subr.mxu0 0.0
    %635 = vmatpush1.msra.mxu0 0.0
    %636 = vmatprep.subr.mxu0 0.0
    %637 = vmatpush1.msra.mxu0 0.0
    %638 = vmatprep.subr.mxu0 0.0
    %639 = vmatpush1.msra.mxu0 0.0
    %640 = vmatprep.subr.mxu0 0.0
    %641 = vmatpush1.msra.mxu0 0.0
    %642 = vmatprep.subr.mxu0 0.0
    %643 = vmatpush1.msra.mxu0 0.0
    %644 = vmatprep.mubr.f32.mxu0 0.0
    %645 = vmatmul.mubr.f32.gmra.mrb[0].mxu0 %v578
    %v646 = vpop.f32.mrb[0].mxu0
    %v647 = vadd.f32 0.0, %v646
    %v648 = vpop.f32.mrb[0].mxu0
    %649 = vdwg.mxu0
    %v650 = vadd.f32 %v150, %v647
    %v651 = vxor.u32 %v650, 2147483648
    %v652 = vmul.f32 %v651, 1.442695
    %v653 = vpow.pop %v652
    %v654 = vadd.f32 %v653, 1.0
    %v655 = vrcp.pop %v654
    %v656 = vmul.f32 1.0, %v655
    %v657 = vmul.f32 %v656, 2.0
    %v658 = vsub.f32 %v657, 1.0
    %v659 = vmul.f32 %v656, %v568
    %661 = vrot.lane.b32.xlu0 %v658, 64
    %v662 = vpop.permute.xlu0 %661
    %v664 = vmul.f32 %v656, %v662
    %666 = vrot.lane.b32.xlu0 %v664, 32
    %v667 = vpop.permute.xlu0 %666
    %v669 = vadd.f32 %v659, %v667
    %v670 = vtanh.pop %v669
    %672 = vrot.lane.b32.xlu0 %v670, 64
    %v673 = vpop.permute.xlu0 %672
    %v675 = vmul.f32 %v656, %v673
    %677 = vrot.lane.b32.xlu0 %v675, 32
    %v678 = vpop.permute.xlu0 %677
    %v679 = vsel %vm172, %v678, 0
    %681 = vmatprep.subr.mxu0 0.0
    %682 = vmatpush1.msra.mxu0 %v168
    %683 = vmatprep.subr.mxu0 0.0
    %684 = vmatpush1.msra.mxu0 %v169
    %685 = vmatprep.subr.mxu0 0.0
    %686 = vmatpush1.msra.mxu0 %v170
    %687 = vmatprep.subr.mxu0 0.0
    %688 = vmatpush1.msra.mxu0 %v171
    %689 = vmatprep.subr.mxu0 0.0
    %690 = vmatpush1.msra.mxu0 0.0
    %691 = vmatprep.subr.mxu0 0.0
    %692 = vmatpush1.msra.mxu0 0.0
    %693 = vmatprep.subr.mxu0 0.0
    %694 = vmatpush1.msra.mxu0 0.0
    %695 = vmatprep.subr.mxu0 0.0
    %696 = vmatpush1.msra.mxu0 0.0
    %697 = vmatprep.subr.mxu0 0.0
    %698 = vmatpush1.msra.mxu0 0.0
    %699 = vmatprep.subr.mxu0 0.0
    %700 = vmatpush1.msra.mxu0 0.0
    %701 = vmatprep.subr.mxu0 0.0
    %702 = vmatpush1.msra.mxu0 0.0
    %703 = vmatprep.subr.mxu0 0.0
    %704 = vmatpush1.msra.mxu0 0.0
    %705 = vmatprep.subr.mxu0 0.0
    %706 = vmatpush1.msra.mxu0 0.0
    %707 = vmatprep.subr.mxu0 0.0
    %708 = vmatpush1.msra.mxu0 0.0
    %709 = vmatprep.subr.mxu0 0.0
    %710 = vmatpush1.msra.mxu0 0.0
    %711 = vmatprep.subr.mxu0 0.0
    %712 = vmatpush1.msra.mxu0 0.0
    %713 = vmatprep.subr.mxu0 0.0
    %714 = vmatpush1.msra.mxu0 0.0
    %715 = vmatprep.subr.mxu0 0.0
    %716 = vmatpush1.msra.mxu0 0.0
    %717 = vmatprep.subr.mxu0 0.0
    %718 = vmatpush1.msra.mxu0 0.0
    %719 = vmatprep.subr.mxu0 0.0
    %720 = vmatpush1.msra.mxu0 0.0
    %721 = vmatprep.subr.mxu0 0.0
    %722 = vmatpush1.msra.mxu0 0.0
    %723 = vmatprep.subr.mxu0 0.0
    %724 = vmatpush1.msra.mxu0 0.0
    %725 = vmatprep.subr.mxu0 0.0
    %726 = vmatpush1.msra.mxu0 0.0
    %727 = vmatprep.subr.mxu0 0.0
    %728 = vmatpush1.msra.mxu0 0.0
    %729 = vmatprep.subr.mxu0 0.0
    %730 = vmatpush1.msra.mxu0 0.0
    %731 = vmatprep.subr.mxu0 0.0
    %732 = vmatpush1.msra.mxu0 0.0
    %733 = vmatprep.subr.mxu0 0.0
    %734 = vmatpush1.msra.mxu0 0.0
    %735 = vmatprep.subr.mxu0 0.0
    %736 = vmatpush1.msra.mxu0 0.0
    %737 = vmatprep.subr.mxu0 0.0
    %738 = vmatpush1.msra.mxu0 0.0
    %739 = vmatprep.subr.mxu0 0.0
    %740 = vmatpush1.msra.mxu0 0.0
    %741 = vmatprep.subr.mxu0 0.0
    %742 = vmatpush1.msra.mxu0 0.0
    %743 = vmatprep.subr.mxu0 0.0
    %744 = vmatpush1.msra.mxu0 0.0
    %745 = vmatprep.mubr.f32.mxu0 0.0
    %746 = vmatmul.mubr.f32.gmra.mrb[0].mxu0 %v679
    %v747 = vpop.f32.mrb[0].mxu0
    %v748 = vadd.f32 0.0, %v747
    %v749 = vpop.f32.mrb[0].mxu0
    %750 = vdwg.mxu0
    %v751 = vadd.f32 %v155, %v748
    %v752 = vxor.u32 %v751, 2147483648
    %v753 = vmul.f32 %v752, 1.442695
    %v754 = vpow.pop %v753
    %v755 = vadd.f32 %v754, 1.0
    %v756 = vrcp.pop %v755
    %v757 = vmul.f32 1.0, %v756
    %v758 = vmul.f32 %v757, 2.0
    %v759 = vsub.f32 %v758, 1.0
    %v760 = vmul.f32 %v757, %v669
    %762 = vrot.lane.b32.xlu0 %v759, 64
    %v763 = vpop.permute.xlu0 %762
    %v765 = vmul.f32 %v757, %v763
    %767 = vrot.lane.b32.xlu0 %v765, 32
    %v768 = vpop.permute.xlu0 %767
    %v770 = vadd.f32 %v760, %v768
    %v771 = vtanh.pop %v770
    %773 = vrot.lane.b32.xlu0 %v771, 64
    %v774 = vpop.permute.xlu0 %773
    %v776 = vmul.f32 %v757, %v774
    %778 = vrot.lane.b32.xlu0 %v776, 32
    %v779 = vpop.permute.xlu0 %778
    %v780 = vsel %vm172, %v779, 0
    %782 = vmatprep.subr.mxu0 0.0
    %783 = vmatpush1.msra.mxu0 %v168
    %784 = vmatprep.subr.mxu0 0.0
    %785 = vmatpush1.msra.mxu0 %v169
    %786 = vmatprep.subr.mxu0 0.0
    %787 = vmatpush1.msra.mxu0 %v170
    %788 = vmatprep.subr.mxu0 0.0
    %789 = vmatpush1.msra.mxu0 %v171
    %790 = vmatprep.subr.mxu0 0.0
    %791 = vmatpush1.msra.mxu0 0.0
    %792 = vmatprep.subr.mxu0 0.0
    %793 = vmatpush1.msra.mxu0 0.0
    %794 = vmatprep.subr.mxu0 0.0
    %795 = vmatpush1.msra.mxu0 0.0
    %796 = vmatprep.subr.mxu0 0.0
    %797 = vmatpush1.msra.mxu0 0.0
    %798 = vmatprep.subr.mxu0 0.0
    %799 = vmatpush1.msra.mxu0 0.0
    %800 = vmatprep.subr.mxu0 0.0
    %801 = vmatpush1.msra.mxu0 0.0
    %802 = vmatprep.subr.mxu0 0.0
    %803 = vmatpush1.msra.mxu0 0.0
    %804 = vmatprep.subr.mxu0 0.0
    %805 = vmatpush1.msra.mxu0 0.0
    %806 = vmatprep.subr.mxu0 0.0
    %807 = vmatpush1.msra.mxu0 0.0
    %808 = vmatprep.subr.mxu0 0.0
    %809 = vmatpush1.msra.mxu0 0.0
    %810 = vmatprep.subr.mxu0 0.0
    %811 = vmatpush1.msra.mxu0 0.0
    %812 = vmatprep.subr.mxu0 0.0
    %813 = vmatpush1.msra.mxu0 0.0
    %814 = vmatprep.subr.mxu0 0.0
    %815 = vmatpush1.msra.mxu0 0.0
    %816 = vmatprep.subr.mxu0 0.0
    %817 = vmatpush1.msra.mxu0 0.0
    %818 = vmatprep.subr.mxu0 0.0
    %819 = vmatpush1.msra.mxu0 0.0
    %820 = vmatprep.subr.mxu0 0.0
    %821 = vmatpush1.msra.mxu0 0.0
    %822 = vmatprep.subr.mxu0 0.0
    %823 = vmatpush1.msra.mxu0 0.0
    %824 = vmatprep.subr.mxu0 0.0
    %825 = vmatpush1.msra.mxu0 0.0
    %826 = vmatprep.subr.mxu0 0.0
    %827 = vmatpush1.msra.mxu0 0.0
    %828 = vmatprep.subr.mxu0 0.0
    %829 = vmatpush1.msra.mxu0 0.0
    %830 = vmatprep.subr.mxu0 0.0
    %831 = vmatpush1.msra.mxu0 0.0
    %832 = vmatprep.subr.mxu0 0.0
    %833 = vmatpush1.msra.mxu0 0.0
    %834 = vmatprep.subr.mxu0 0.0
    %835 = vmatpush1.msra.mxu0 0.0
    %836 = vmatprep.subr.mxu0 0.0
    %837 = vmatpush1.msra.mxu0 0.0
    %838 = vmatprep.subr.mxu0 0.0
    %839 = vmatpush1.msra.mxu0 0.0
    %840 = vmatprep.subr.mxu0 0.0
    %841 = vmatpush1.msra.mxu0 0.0
    %842 = vmatprep.subr.mxu0 0.0
    %843 = vmatpush1.msra.mxu0 0.0
    %844 = vmatprep.subr.mxu0 0.0
    %845 = vmatpush1.msra.mxu0 0.0
    %846 = vmatprep.mubr.f32.mxu0 0.0
    %847 = vmatmul.mubr.f32.gmra.mrb[0].mxu0 %v780
    %v848 = vpop.f32.mrb[0].mxu0
    %v849 = vadd.f32 0.0, %v848
    %v850 = vpop.f32.mrb[0].mxu0
    %851 = vdwg.mxu0
    %v852 = vadd.f32 %v160, %v849
    %v853 = vxor.u32 %v852, 2147483648
    %v854 = vmul.f32 %v853, 1.442695
    %v855 = vpow.pop %v854
    %v856 = vadd.f32 %v855, 1.0
    %v857 = vrcp.pop %v856
    %v858 = vmul.f32 1.0, %v857
    %v859 = vmul.f32 %v858, 2.0
    %v860 = vsub.f32 %v859, 1.0
    %v861 = vmul.f32 %v858, %v770
    %863 = vrot.lane.b32.xlu0 %v860, 64
    %v864 = vpop.permute.xlu0 %863
    %v866 = vmul.f32 %v858, %v864
    %868 = vrot.lane.b32.xlu0 %v866, 32
    %v869 = vpop.permute.xlu0 %868
    %v871 = vadd.f32 %v861, %v869
    %v872 = vtanh.pop %v871
    %874 = vrot.lane.b32.xlu0 %v872, 64
    %v875 = vpop.permute.xlu0 %874
    %v877 = vmul.f32 %v858, %v875
    %879 = vrot.lane.b32.xlu0 %v877, 32
    %v880 = vpop.permute.xlu0 %879
    %v881 = vsel %vm172, %v880, 0
    %883 = vmatprep.subr.mxu0 0.0
    %884 = vmatpush1.msra.mxu0 %v168
    %885 = vmatprep.subr.mxu0 0.0
    %886 = vmatpush1.msra.mxu0 %v169
    %887 = vmatprep.subr.mxu0 0.0
    %888 = vmatpush1.msra.mxu0 %v170
    %889 = vmatprep.subr.mxu0 0.0
    %890 = vmatpush1.msra.mxu0 %v171
    %891 = vmatprep.subr.mxu0 0.0
    %892 = vmatpush1.msra.mxu0 0.0
    %893 = vmatprep.subr.mxu0 0.0
    %894 = vmatpush1.msra.mxu0 0.0
    %895 = vmatprep.subr.mxu0 0.0
    %896 = vmatpush1.msra.mxu0 0.0
    %897 = vmatprep.subr.mxu0 0.0
    %898 = vmatpush1.msra.mxu0 0.0
    %899 = vmatprep.subr.mxu0 0.0
    %900 = vmatpush1.msra.mxu0 0.0
    %901 = vmatprep.subr.mxu0 0.0
    %902 = vmatpush1.msra.mxu0 0.0
    %903 = vmatprep.subr.mxu0 0.0
    %904 = vmatpush1.msra.mxu0 0.0
    %905 = vmatprep.subr.mxu0 0.0
    %906 = vmatpush1.msra.mxu0 0.0
    %907 = vmatprep.subr.mxu0 0.0
    %908 = vmatpush1.msra.mxu0 0.0
    %909 = vmatprep.subr.mxu0 0.0
    %910 = vmatpush1.msra.mxu0 0.0
    %911 = vmatprep.subr.mxu0 0.0
    %912 = vmatpush1.msra.mxu0 0.0
    %913 = vmatprep.subr.mxu0 0.0
    %914 = vmatpush1.msra.mxu0 0.0
    %915 = vmatprep.subr.mxu0 0.0
    %916 = vmatpush1.msra.mxu0 0.0
    %917 = vmatprep.subr.mxu0 0.0
    %918 = vmatpush1.msra.mxu0 0.0
    %919 = vmatprep.subr.mxu0 0.0
    %920 = vmatpush1.msra.mxu0 0.0
    %921 = vmatprep.subr.mxu0 0.0
    %922 = vmatpush1.msra.mxu0 0.0
    %923 = vmatprep.subr.mxu0 0.0
    %924 = vmatpush1.msra.mxu0 0.0
    %925 = vmatprep.subr.mxu0 0.0
    %926 = vmatpush1.msra.mxu0 0.0
    %927 = vmatprep.subr.mxu0 0.0
    %928 = vmatpush1.msra.mxu0 0.0
    %929 = vmatprep.subr.mxu0 0.0
    %930 = vmatpush1.msra.mxu0 0.0
    %931 = vmatprep.subr.mxu0 0.0
    %932 = vmatpush1.msra.mxu0 0.0
    %933 = vmatprep.subr.mxu0 0.0
    %934 = vmatpush1.msra.mxu0 0.0
    %935 = vmatprep.subr.mxu0 0.0
    %936 = vmatpush1.msra.mxu0 0.0
    %937 = vmatprep.subr.mxu0 0.0
    %938 = vmatpush1.msra.mxu0 0.0
    %939 = vmatprep.subr.mxu0 0.0
    %940 = vmatpush1.msra.mxu0 0.0
    %941 = vmatprep.subr.mxu0 0.0
    %942 = vmatpush1.msra.mxu0 0.0
    %943 = vmatprep.subr.mxu0 0.0
    %944 = vmatpush1.msra.mxu0 0.0
    %945 = vmatprep.subr.mxu0 0.0
    %946 = vmatpush1.msra.mxu0 0.0
    %947 = vmatprep.mubr.f32.mxu0 0.0
    %948 = vmatmul.mubr.f32.gmra.mrb[0].mxu0 %v881
    %v949 = vpop.f32.mrb[0].mxu0
    %v950 = vadd.f32 0.0, %v949
    %v951 = vpop.f32.mrb[0].mxu0
    %952 = vdwg.mxu0
    %v953 = vadd.f32 %v165, %v950
    %v954 = vxor.u32 %v953, 2147483648
    %v955 = vmul.f32 %v954, 1.442695
    %v956 = vpow.pop %v955
    %v957 = vadd.f32 %v956, 1.0
    %v958 = vrcp.pop %v957
    %v959 = vmul.f32 1.0, %v958
    %v960 = vmul.f32 %v959, 2.0
    %v961 = vsub.f32 %v960, 1.0
    %v962 = vmul.f32 %v959, %v871
    %964 = vrot.lane.b32.xlu0 %v961, 64
    %v965 = vpop.permute.xlu0 %964
    %v967 = vmul.f32 %v959, %v965
    %969 = vrot.lane.b32.xlu0 %v967, 32
    %v970 = vpop.permute.xlu0 %969
    %v972 = vadd.f32 %v962, %v970
    %v973 = vtanh.pop %v972
    %975 = vrot.lane.b32.xlu0 %v973, 64
    %v976 = vpop.permute.xlu0 %975
    %v978 = vmul.f32 %v959, %v976
    %v979 = vld [vmem:[%s4] sm:$0xff]
    %v980 = vld [vmem:[%s4 + $0x8] sm:$0xff]
    %v981 = vld [vmem:[%s4 + $0x10] sm:$0xff]
    %v982 = vld [vmem:[%s4 + $0x18] sm:$0xff]
    %984 = vrot.lane.b32.xlu0 %v978, 32
    %v985 = vpop.permute.xlu0 %984
    %v986 = vsel %vm172, %v985, 0
    %988 = vmatprep.subr.mxu0 0.0
    %989 = vmatpush1.msra.mxu0 %v979
    %990 = vmatprep.subr.mxu0 0.0
    %991 = vmatpush1.msra.mxu0 %v980
    %992 = vmatprep.subr.mxu0 0.0
    %993 = vmatpush1.msra.mxu0 %v981
    %994 = vmatprep.subr.mxu0 0.0
    %995 = vmatpush1.msra.mxu0 %v982
    %996 = vmatprep.subr.mxu0 0.0
    %997 = vmatpush1.msra.mxu0 0.0
    %998 = vmatprep.subr.mxu0 0.0
    %999 = vmatpush1.msra.mxu0 0.0
    %1000 = vmatprep.subr.mxu0 0.0
    %1001 = vmatpush1.msra.mxu0 0.0
    %1002 = vmatprep.subr.mxu0 0.0
    %1003 = vmatpush1.msra.mxu0 0.0
    %1004 = vmatprep.subr.mxu0 0.0
    %1005 = vmatpush1.msra.mxu0 0.0
    %1006 = vmatprep.subr.mxu0 0.0
    %1007 = vmatpush1.msra.mxu0 0.0
    %1008 = vmatprep.subr.mxu0 0.0
    %1009 = vmatpush1.msra.mxu0 0.0
    %1010 = vmatprep.subr.mxu0 0.0
    %1011 = vmatpush1.msra.mxu0 0.0
    %1012 = vmatprep.subr.mxu0 0.0
    %1013 = vmatpush1.msra.mxu0 0.0
    %1014 = vmatprep.subr.mxu0 0.0
    %1015 = vmatpush1.msra.mxu0 0.0
    %1016 = vmatprep.subr.mxu0 0.0
    %1017 = vmatpush1.msra.mxu0 0.0
    %1018 = vmatprep.subr.mxu0 0.0
    %1019 = vmatpush1.msra.mxu0 0.0
    %1020 = vmatprep.subr.mxu0 0.0
    %1021 = vmatpush1.msra.mxu0 0.0
    %1022 = vmatprep.subr.mxu0 0.0
    %1023 = vmatpush1.msra.mxu0 0.0
    %1024 = vmatprep.subr.mxu0 0.0
    %1025 = vmatpush1.msra.mxu0 0.0
    %1026 = vmatprep.subr.mxu0 0.0
    %1027 = vmatpush1.msra.mxu0 0.0
    %1028 = vmatprep.subr.mxu0 0.0
    %1029 = vmatpush1.msra.mxu0 0.0
    %1030 = vmatprep.subr.mxu0 0.0
    %1031 = vmatpush1.msra.mxu0 0.0
    %1032 = vmatprep.subr.mxu0 0.0
    %1033 = vmatpush1.msra.mxu0 0.0
    %1034 = vmatprep.subr.mxu0 0.0
    %1035 = vmatpush1.msra.mxu0 0.0
    %1036 = vmatprep.subr.mxu0 0.0
    %1037 = vmatpush1.msra.mxu0 0.0
    %1038 = vmatprep.subr.mxu0 0.0
    %1039 = vmatpush1.msra.mxu0 0.0
    %1040 = vmatprep.subr.mxu0 0.0
    %1041 = vmatpush1.msra.mxu0 0.0
    %1042 = vmatprep.subr.mxu0 0.0
    %1043 = vmatpush1.msra.mxu0 0.0
    %1044 = vmatprep.subr.mxu0 0.0
    %1045 = vmatpush1.msra.mxu0 0.0
    %1046 = vmatprep.subr.mxu0 0.0
    %1047 = vmatpush1.msra.mxu0 0.0
    %1048 = vmatprep.subr.mxu0 0.0
    %1049 = vmatpush1.msra.mxu0 0.0
    %1050 = vmatprep.subr.mxu0 0.0
    %1051 = vmatpush1.msra.mxu0 0.0
    %1052 = vmatprep.mubr.f32.mxu0 0.0
    %1053 = vmatmul.mubr.f32.gmra.mrb[0].mxu0 %v986
    %v1054 = vpop.f32.mrb[0].mxu0
    %v1055 = vadd.f32 0.0, %v1054
    %v1056 = vpop.f32.mrb[0].mxu0
    %1057 = vdwg.mxu0
    %vm1058 = vcmask 64512
    %1059 = vst.msk [vmem:[#allocation2] sm:$0xff] %vm1058, %v1055
    // Predicated region
    $region22: #{tpu_custom_call.1} parent=1 // pred_check
      _
    $region23: #{tpu_custom_call.1} parent=1 // pred_check_branch
      %1061 = sbr.rel (0) target = $region25
    $region24: #{tpu_custom_call.1} parent=1 // pred_region
      %s1063 = ssub.s32 128, 128
      %1064 = vsyncadd [#allocation3], %s1063
      %s1066 = sshll.u32 [#allocation2], 4
      %s1067 = int_to_ptr.vmem [resolvable:$true] %s1066
      %1069 = dma.vmem_to_hbm [thread:$0]  %s1067, 128, %s5, [#allocation3]
    $region25: #{tpu_custom_call.1} parent=1 // pred_fallthru
      _
    // Predicated region
    $region26: #{tpu_custom_call.1} parent=1 // pred_check
      _
    $region27: #{tpu_custom_call.1} parent=1 // pred_check_branch
      %1071 = sbr.rel (0) target = $region29
    $region28: #{tpu_custom_call.1} parent=1 // pred_region
      %1072 = dma.done [#allocation3], 128
    $region29: #{tpu_custom_call.1} parent=1 // pred_fallthru
      _
    %1073 = vsyncpa [#allocation3], 1

</llo_original>
